<compile_context>
chip_gen: v5e
topology: v5e:2x2
jax: 0.10.0
libtpu: 0.0.40
codegen_flags: <defaults>
</compile_context>

<pallas_src>
import functools
import math

import numpy as np
import jax
import jax.numpy as jnp
from jax import lax
from jax.experimental import pallas as pl
from jax.experimental.pallas import tpu as pltpu

_NEG = -1e30  # pseudo -inf that stays NaN-free through exp/log on TPU


def _round_up(x, m):
    return (x + m - 1) // m * m


def _next_pow2(x):
    return 1 << max(0, int(x) - 1).bit_length()


# ---------------------------------------------------------------------------
# Kernel A: per-T-tile partials of batch-softmax entropy and per-sample logit sum
# ---------------------------------------------------------------------------
def _trust_kl_kernel(x_ref, out_ref, *, c_real, t_real, t_tile, b_real):
    x = x_ref[...].astype(jnp.float32)                       # (B_A, tT, C_pad)
    B_A, tT, Cp = x.shape

    valid_b = lax.broadcasted_iota(jnp.int32, (B_A, 1, 1), 0) < b_real
    t_base = pl.program_id(0) * t_tile
    valid_t = (t_base + lax.broadcasted_iota(jnp.int32, (1, tT, 1), 1)) < t_real
    valid_c = lax.broadcasted_iota(jnp.int32, (1, 1, Cp), 2) < c_real
    valid_tc = jnp.logical_and(valid_t, valid_c)             # (1, tT, Cp)

    # softmax over the *batch* axis (faithful to the reference), masked to real rows.
    m = jnp.max(jnp.where(valid_b, x, _NEG), axis=0, keepdims=True)     # (1, tT, Cp)
    e = jnp.where(valid_b, jnp.exp(x - m), 0.0)
    z = jnp.sum(e, axis=0, keepdims=True)                               # (1, tT, Cp)
    logz = jnp.log(z)                        # log only on the 1/B-sized normaliser
    p = e / z
    # H = -sum_c p*log p  ==  sum_c p*(logz - (x - m))   (drops the full-tensor log)
    h_terms = jnp.where(valid_tc, p * (logz - (x - m)), 0.0)
    hsum = jnp.sum(jnp.sum(h_terms, axis=2), axis=1, keepdims=True)     # (B_A, 1)
    xsum = jnp.sum(jnp.sum(jnp.where(valid_tc, x, 0.0), axis=2), axis=1,
                   keepdims=True)                                       # (B_A, 1)

    lane = lax.broadcasted_iota(jnp.int32, (B_A, 128), 1)
    out_ref[0] = jnp.where(lane == 0, hsum, jnp.where(lane == 1, xsum, 0.0))


# ---------------------------------------------------------------------------
# Kernel B: CTC forward DP, PACK samples per grid step (parallel batch axis)
# ---------------------------------------------------------------------------
def _ctc_kernel(preds_size_ref, length_ref,   # SMEM scalar prefetch, (B_pad,) int32
                x_ref,                        # VMEM (PACK, T_pad, C_pad) input dtype
                ext_ref,                      # VMEM (1, PACK, S_pad) int32
                skip_ref,                     # VMEM (1, PACK, S_pad) f32
                out_ref,                      # VMEM (1, PACK, 128) f32
                g_ref,                        # VMEM scratch (T_pad, PACK, S_pad) f32
                *, pack, t_real):
    grp = pl.program_id(0)
    _, T_pad, Cp = x_ref.shape
    S_pad = ext_ref.shape[-1]

    ext = ext_ref[0]                          # (PACK, S_pad) int32
    skip = skip_ref[0]                        # (PACK, S_pad) f32

    # Gather lp[t, ext[s]] for all (t, s): one MXU matmul per packed sample, kept in
    # the input dtype (bf16-native MXU path when the logits are bf16), f32 accumulate.
    sub = lax.broadcasted_iota(jnp.int32, (Cp, S_pad), 0)
    rows = []
    for r in range(pack):
        oh = (jnp.broadcast_to(ext[r:r + 1, :], (Cp, S_pad)) == sub).astype(x_ref.dtype)
        rows.append(jnp.dot(x_ref[r], oh, preferred_element_type=jnp.float32))
    # (PACK, T, S) -> (T, PACK, S) so the per-step read g_ref[t] is one dense tile.
    g_ref[...] = pltpu.einshape("pts->tps", jnp.stack(rows, axis=0))

    # Per-row scalar metadata from SMEM prefetch, broadcast into (PACK, 1) columns.
    row = lax.broadcasted_iota(jnp.int32, (pack, 1), 0)
    t_b = jnp.zeros((pack, 1), jnp.int32)
    len_b = jnp.zeros((pack, 1), jnp.int32)
    for r in range(pack):
        t_b = jnp.where(row == r, preds_size_ref[grp * pack + r], t_b)
        len_b = jnp.where(row == r, length_ref[grp * pack + r], len_b)
    s_b = 2 * len_b + 1

    # Loop-invariant vregs hoisted out of the recursion body.
    lane = lax.broadcasted_iota(jnp.int32, (pack, S_pad), 1)
    neg = jnp.full((pack, S_pad), _NEG, jnp.float32)
    mask1 = lane >= 1
    can_skip = jnp.logical_and(lane >= 2, skip > 0.5)

    alpha0 = jnp.where(lane < 2, g_ref[0], neg)

    def step(t, alpha):
        g_t = g_ref[t]                                             # (PACK, S_pad)
        a1 = jnp.where(mask1, pltpu.roll(alpha, 1, 1), neg)        # alpha[s-1]
        a2 = jnp.where(can_skip, pltpu.roll(alpha, 2, 1), neg)     # alpha[s-2]
        m = jnp.maximum(jnp.maximum(alpha, a1), a2)
        # 3-way logsumexp with the max term's exp (== 1) dropped: 2 exps instead of 3.
        is0 = jnp.logical_and(alpha >= a1, alpha >= a2)
        is1 = jnp.logical_and(jnp.logical_not(is0), a1 >= a2)
        nm1 = jnp.where(is0, a1, alpha)
        nm2 = jnp.where(jnp.logical_or(is0, is1), a2, a1)
        lse = m + jnp.log(1.0 + jnp.exp(nm1 - m) + jnp.exp(nm2 - m))
        new = g_t + lse
        return jnp.where(t < t_b, new, alpha)   # per-row freeze past its input length

    alpha = lax.fori_loop(1, t_real, step, alpha0, unroll=4)

    sel = jnp.logical_or(lane == s_b - 1, lane == s_b - 2)
    a_sel = jnp.where(sel, alpha, neg)
    m_f = jnp.max(a_sel, axis=1, keepdims=True)
    lse_f = m_f + jnp.log(jnp.sum(jnp.exp(a_sel - m_f), axis=1, keepdims=True))
    loss = -lse_f                                                  # (PACK, 1)
    loss = jnp.where(loss > 1e29, 0.0, loss)                       # zero_infinity
    loss = loss / jnp.maximum(len_b, 1).astype(jnp.float32)        # 'mean' reduction step 1
    out_ref[0] = jnp.broadcast_to(loss, (pack, 128))


# ---------------------------------------------------------------------------
# Wrapper mirroring the PyTorch module's forward
# ---------------------------------------------------------------------------
class RobustSmoothLossCTC:
    def __init__(self, num_iter, alpha=0.0, exp_base=0, transit_time_ratio=0.2, blank=0):
        if not exp_base > 0:
            raise ValueError("The exp_base has to be larger than zero")
        self.total_iterations = num_iter
        self.exp_base = float(exp_base)
        self.transit_time_ratio = float(transit_time_ratio)
        self.blank = int(blank)
        self.confidence = 1.0 - alpha   # kept for parity with the module; unused in forward
        self.smoothing = alpha
        self.epsilon = None

    def __call__(self, input, labels_index, preds_size, length, cur_time):
        if not (0 <= cur_time <= self.total_iterations):
            raise ValueError("cur_time must lie in [0, total_iterations]")
        x = jnp.asarray(input)
        B, T, C = x.shape
        C_pad = _round_up(C, 128)
        itemsize = jnp.dtype(x.dtype).itemsize

        labels_index = jnp.asarray(labels_index, jnp.int32)        # [B, L_max]
        L_max = int(labels_index.shape[1])
        S_pad = _round_up(2 * L_max + 1, 128)

        # ---- choose sample packing + tiles (VMEM-aware; v7x has only 64 MiB) ----
        pack = min(8, _next_pow2(B))
        T_pad8 = _round_up(T, 8)
        while pack > 1 and (2 * pack * T_pad8 * C_pad * itemsize
                            + 8 * T_pad8 * pack * S_pad) > 24 * 1024 * 1024:
            pack //= 2
        B_pad = _round_up(B, max(8, 2 * pack))     # even group count -> both v7x TCs
        n_groups = B_pad // pack
        B_A = _round_up(B, 8)

        rows_budget = (2 * 1024 * 1024) // max(1, B_A * C_pad * itemsize)
        t_tile = max(8, min(_round_up(T, 8), (rows_budget // 8) * 8))
        T_pad = _round_up(T, t_tile)
        n_t = T_pad // t_tile

        x_pad = jnp.pad(x, ((0, B_pad - B), (0, T_pad - T), (0, C_pad - C)))

        # ---- Kernel A: per-T-tile entropy / logit-sum partials -------------------
        partials = pl.pallas_call(
            functools.partial(_trust_kl_kernel, c_real=C, t_real=T,
                              t_tile=t_tile, b_real=B),
            out_shape=jax.ShapeDtypeStruct((n_t, B_A, 128), jnp.float32),
            grid_spec=pltpu.PrefetchScalarGridSpec(
                num_scalar_prefetch=0,
                grid=(n_t,),
                in_specs=[pl.BlockSpec((B_A, t_tile, C_pad), lambda i: (0, i, 0))],
                out_specs=pl.BlockSpec((1, B_A, 128), lambda i: (i, 0, 0))),
            compiler_params=pltpu.CompilerParams(
                dimension_semantics=("parallel",),
                vmem_limit_bytes=32 * 1024 * 1024),
        )(x_pad)

        hsum = jnp.sum(partials[:, :B, 0], axis=0)                 # [B]
        xsum = jnp.sum(partials[:, :B, 1], axis=0)                 # [B]
        trust = 1.0 - hsum / (float(T) * math.log(float(C)))
        xmean = xsum / float(T * C)

        global_trust = 1.0 / (1.0 + math.exp(
            -self.exp_base * (cur_time / self.total_iterations - self.transit_time_ratio)))
        epsilon = global_trust * trust                             # [B]
        self.epsilon = epsilon
        kl_per = (1.0 / C) * (math.log(1.0 / C) - xmean)           # [B]
        kl_loss = jnp.mean(epsilon * kl_per)

        # ---- Kernel B: CTC forward DP, PACK samples per grid step ----------------
        labels_pad = jnp.zeros((B_pad, max(L_max, 1)), jnp.int32)
        labels_pad = labels_pad.at[:B, :L_max].set(labels_index)
        ext = jnp.full((B_pad, S_pad), self.blank, jnp.int32)
        if L_max > 0:
            ext = ext.at[:, 1:2 * L_max:2].set(labels_pad[:, :L_max])
        ext_m2 = jnp.pad(ext, ((0, 0), (2, 0)))[:, :S_pad]
        s_idx = jnp.arange(S_pad)[None, :]
        skip = ((s_idx >= 2) & (ext != self.blank) & (ext != ext_m2)).astype(jnp.float32)

        preds_size_pad = jnp.zeros((B_pad,), jnp.int32).at[:B].set(
            jnp.asarray(preds_size, jnp.int32))
        length_pad = jnp.zeros((B_pad,), jnp.int32).at[:B].set(
            jnp.asarray(length, jnp.int32))

        ext3 = ext.reshape(n_groups, pack, S_pad)
        skip3 = skip.reshape(n_groups, pack, S_pad)

        ctc_raw = pl.pallas_call(
            functools.partial(_ctc_kernel, pack=pack, t_real=T),
            out_shape=jax.ShapeDtypeStruct((n_groups, pack, 128), jnp.float32),
            grid_spec=pltpu.PrefetchScalarGridSpec(
                num_scalar_prefetch=2,
                grid=(n_groups,),
                in_specs=[
                    pl.BlockSpec((pack, T_pad, C_pad), lambda g, ps, ln: (g, 0, 0)),
                    pl.BlockSpec((1, pack, S_pad), lambda g, ps, ln: (g, 0, 0)),
                    pl.BlockSpec((1, pack, S_pad), lambda g, ps, ln: (g, 0, 0)),
                ],
                out_specs=pl.BlockSpec((1, pack, 128), lambda g, ps, ln: (g, 0, 0)),
                scratch_shapes=[pltpu.VMEM((T_pad, pack, S_pad), jnp.float32)]),
            compiler_params=pltpu.CompilerParams(
                dimension_semantics=("parallel",),
                vmem_limit_bytes=32 * 1024 * 1024),
        )(preds_size_pad, length_pad, x_pad, ext3, skip3)

        ctc_loss = jnp.mean(ctc_raw.reshape(B_pad, 128)[:B, 0])   # 'mean' reduction step 2
        return ctc_loss + kl_loss


# ---------------------------------------------------------------------------
# Pure-numpy reference mirroring the PyTorch forward (for verification)
# ---------------------------------------------------------------------------
def reference_loss(logits, labels, label_lens, pred_lens, cur_time,
                   num_iter, exp_base, transit_time_ratio, blank=0):
    x = np.asarray(logits, np.float64)
    B, T, C = x.shape

    # epsilon (softmax over batch of the permuted input, as written in the module)
    xp = np.transpose(x, (1, 0, 2))                       # [T, B, C]
    m = xp.max(axis=1, keepdims=True)
    e = np.exp(xp - m)
    p = e / e.sum(axis=1, keepdims=True)
    pe = p + 1e-12
    H = (-pe * np.log(pe)).sum(axis=2)                    # [T, B]
    trust = (1.0 - H / np.log(C)).mean(axis=0)            # [B]
    g = 1.0 / (1.0 + np.exp(-exp_base * (cur_time / num_iter - transit_time_ratio)))
    eps = g * trust

    # KLDivLoss(reduction='none')(input=logits, target=1/C).mean() per sample
    kl = 0.0
    for b in range(B):
        pw = (1.0 / C) * (np.log(1.0 / C) - x[b])
        kl += pw.mean() * eps[b]
    kl /= B

    # CTC forward (inputs used directly as log-probs, like nn.CTCLoss on raw logits)
    losses = np.zeros(B)
    for b in range(B):
        L = int(label_lens[b]); Tb = int(pred_lens[b])
        lab = np.asarray(labels[b][:L])
        S = 2 * L + 1
        ext = np.full(S, blank, dtype=np.int64)
        ext[1::2] = lab
        lp = x[b]
        alpha = np.full(S, -np.inf)
        alpha[0] = lp[0, ext[0]]
        if S > 1:
            alpha[1] = lp[0, ext[1]]
        for t in range(1, Tb):
            new = np.full(S, -np.inf)
            for s in range(S):
                cands = [alpha[s]]
                if s >= 1:
                    cands.append(alpha[s - 1])
                if s >= 2 and ext[s] != blank and ext[s] != ext[s - 2]:
                    cands.append(alpha[s - 2])
                mm = max(cands)
                if np.isneginf(mm):
                    new[s] = -np.inf
                else:
                    new[s] = lp[t, ext[s]] + mm + np.log(np.sum(np.exp(np.asarray(cands) - mm)))
            alpha = new
        finals = [alpha[S - 1]] + ([alpha[S - 2]] if S >= 2 else [])
        mm = max(finals)
        nll = np.inf if np.isneginf(mm) else -(mm + np.log(np.sum(np.exp(np.asarray(finals) - mm))))
        if np.isinf(nll):
            nll = 0.0                                     # zero_infinity
        losses[b] = nll / max(L, 1)
    return float(losses.mean() + kl)


if __name__ == "__main__":
    B, T, C = 2, 16, 32
    L_MAX = 6
    NUM_ITER, EXP_BASE, TTR = 1000, 5.0, 0.2
    CUR_TIME = 300

    key = jax.random.PRNGKey(0)
    logits = jax.random.normal(key, (B, T, C), dtype=jnp.float32) * 2.0

    # padded targets (blank=0 never appears inside a label), per-sample lengths
    labels_np = np.array([[5, 9, 9, 3, 17, 0],
                          [2, 2, 30, 11, 0, 0]], dtype=np.int32)
    label_lens_np = np.array([5, 4], dtype=np.int32)      # target lengths
    pred_lens_np = np.array([16, 13], dtype=np.int32)     # input (time) lengths

    loss_fn = RobustSmoothLossCTC(num_iter=NUM_ITER, alpha=0.0,
                                  exp_base=EXP_BASE, transit_time_ratio=TTR)
    loss = loss_fn(logits,
                   jnp.asarray(labels_np),
                   jnp.asarray(pred_lens_np),
                   jnp.asarray(label_lens_np),
                   CUR_TIME)
    loss = jax.block_until_ready(loss)

    ref = reference_loss(np.asarray(logits), labels_np, label_lens_np,
                         pred_lens_np, CUR_TIME, NUM_ITER, EXP_BASE, TTR)
    assert np.isfinite(float(loss))
    np.testing.assert_allclose(float(loss), ref, rtol=3e-4, atol=3e-4)
    print("KERNEL_OK")
</pallas_src>

<mosaic_0001>
module attributes {stable_mosaic.version = 11 : i64} {
  func.func @_trust_kl_kernel(%arg0: i32, %arg1: memref<8x16x128xf32, #tpu.memory_space<vmem>>, %arg2: memref<1x8x128xf32, #tpu.memory_space<vmem>>) attributes {dimension_semantics = [#tpu.dimension_semantics<parallel>], iteration_bounds = array<i64: 1>, scalar_prefetch = 0 : i64, scratch_operands = 0 : i64, tpu.core_type = #tpu.core_type<tc>, window_params = [{transform_indices = @transform_0, window_bounds = array<i64: 8, 16, 128>}, {transform_indices = @transform_1, window_bounds = array<i64: 1, 8, 128>}]} {
    %c0 = arith.constant 0 : index
    %c0_0 = arith.constant 0 : index
    %c0_1 = arith.constant 0 : index
    %0 = vector.load %arg1[%c0, %c0_0, %c0_1] : memref<8x16x128xf32, #tpu.memory_space<vmem>>, vector<8x16x128xf32>
    %1 = tpu.iota {dimensions = array<i32: 0>} : vector<8x1x1xi32>
    %c2_i32 = arith.constant 2 : i32
    %2 = vector.broadcast %c2_i32 : i32 to vector<8x1x1xi32>
    %3 = arith.cmpi slt, %1, %2 : vector<8x1x1xi32>
    %c16_i32 = arith.constant 16 : i32
    %4 = arith.muli %arg0, %c16_i32 : i32
    %5 = tpu.iota {dimensions = array<i32: 1>} : vector<1x16x1xi32>
    %6 = vector.broadcast %4 : i32 to vector<1x16x1xi32>
    %7 = arith.addi %6, %5 : vector<1x16x1xi32>
    %c16_i32_2 = arith.constant 16 : i32
    %8 = vector.broadcast %c16_i32_2 : i32 to vector<1x16x1xi32>
    %9 = arith.cmpi slt, %7, %8 : vector<1x16x1xi32>
    %10 = tpu.iota {dimensions = array<i32: 2>} : vector<1x1x128xi32>
    %c32_i32 = arith.constant 32 : i32
    %11 = vector.broadcast %c32_i32 : i32 to vector<1x1x128xi32>
    %12 = arith.cmpi slt, %10, %11 : vector<1x1x128xi32>
    %13 = vector.broadcast %9 : vector<1x16x1xi1> to vector<1x16x128xi1>
    %14 = vector.broadcast %12 : vector<1x1x128xi1> to vector<1x16x128xi1>
    %15 = arith.andi %13, %14 : vector<1x16x128xi1>
    %cst = arith.constant -1.000000e+30 : f32
    %16 = vector.shape_cast %3 : vector<8x1x1xi1> to vector<8x1x1xi1>
    %17 = vector.broadcast %16 : vector<8x1x1xi1> to vector<8x16x128xi1>
    %18 = vector.broadcast %cst : f32 to vector<8x16x128xf32>
    %19 = arith.select %17, %0, %18 : vector<8x16x128xi1>, vector<8x16x128xf32>
    %cst_3 = arith.constant dense<0xFF800000> : vector<16x128xf32>
    %20 = vector.multi_reduction <maximumf>, %19, %cst_3 [0] : vector<8x16x128xf32> to vector<16x128xf32>
    %21 = vector.shape_cast %20 : vector<16x128xf32> to vector<1x16x128xf32>
    %22 = vector.broadcast %21 : vector<1x16x128xf32> to vector<8x16x128xf32>
    %23 = arith.subf %0, %22 : vector<8x16x128xf32>
    %24 = math.exp %23 : vector<8x16x128xf32>
    %cst_4 = arith.constant 0.000000e+00 : f32
    %25 = vector.shape_cast %3 : vector<8x1x1xi1> to vector<8x1x1xi1>
    %26 = vector.broadcast %25 : vector<8x1x1xi1> to vector<8x16x128xi1>
    %27 = vector.broadcast %cst_4 : f32 to vector<8x16x128xf32>
    %28 = arith.select %26, %24, %27 : vector<8x16x128xi1>, vector<8x16x128xf32>
    %cst_5 = arith.constant dense<0.000000e+00> : vector<16x128xf32>
    %29 = vector.multi_reduction <add>, %28, %cst_5 [0] : vector<8x16x128xf32> to vector<16x128xf32>
    %30 = vector.shape_cast %29 : vector<16x128xf32> to vector<1x16x128xf32>
    %31 = math.log %30 : vector<1x16x128xf32>
    %32 = vector.broadcast %30 : vector<1x16x128xf32> to vector<8x16x128xf32>
    %33 = arith.divf %28, %32 : vector<8x16x128xf32>
    %34 = vector.broadcast %21 : vector<1x16x128xf32> to vector<8x16x128xf32>
    %35 = arith.subf %0, %34 : vector<8x16x128xf32>
    %36 = vector.broadcast %31 : vector<1x16x128xf32> to vector<8x16x128xf32>
    %37 = arith.subf %36, %35 : vector<8x16x128xf32>
    %38 = arith.mulf %33, %37 : vector<8x16x128xf32>
    %cst_6 = arith.constant 0.000000e+00 : f32
    %39 = vector.shape_cast %15 : vector<1x16x128xi1> to vector<1x16x128xi1>
    %40 = vector.broadcast %39 : vector<1x16x128xi1> to vector<8x16x128xi1>
    %41 = vector.broadcast %cst_6 : f32 to vector<8x16x128xf32>
    %42 = arith.select %40, %38, %41 : vector<8x16x128xi1>, vector<8x16x128xf32>
    %cst_7 = arith.constant dense<0.000000e+00> : vector<8x16xf32>
    %43 = vector.multi_reduction <add>, %42, %cst_7 [2] : vector<8x16x128xf32> to vector<8x16xf32>
    %cst_8 = arith.constant dense<0.000000e+00> : vector<8xf32>
    %44 = vector.multi_reduction <add>, %43, %cst_8 [1] : vector<8x16xf32> to vector<8xf32>
    %45 = vector.shape_cast %44 : vector<8xf32> to vector<8x1xf32>
    %cst_9 = arith.constant 0.000000e+00 : f32
    %46 = vector.shape_cast %15 : vector<1x16x128xi1> to vector<1x16x128xi1>
    %47 = vector.broadcast %46 : vector<1x16x128xi1> to vector<8x16x128xi1>
    %48 = vector.broadcast %cst_9 : f32 to vector<8x16x128xf32>
    %49 = arith.select %47, %0, %48 : vector<8x16x128xi1>, vector<8x16x128xf32>
    %cst_10 = arith.constant dense<0.000000e+00> : vector<8x16xf32>
    %50 = vector.multi_reduction <add>, %49, %cst_10 [2] : vector<8x16x128xf32> to vector<8x16xf32>
    %cst_11 = arith.constant dense<0.000000e+00> : vector<8xf32>
    %51 = vector.multi_reduction <add>, %50, %cst_11 [1] : vector<8x16xf32> to vector<8xf32>
    %52 = vector.shape_cast %51 : vector<8xf32> to vector<8x1xf32>
    %53 = tpu.iota {dimensions = array<i32: 1>} : vector<8x128xi32>
    %c0_i32 = arith.constant 0 : i32
    %54 = vector.broadcast %c0_i32 : i32 to vector<8x128xi32>
    %55 = arith.cmpi eq, %53, %54 : vector<8x128xi32>
    %c1_i32 = arith.constant 1 : i32
    %56 = vector.broadcast %c1_i32 : i32 to vector<8x128xi32>
    %57 = arith.cmpi eq, %53, %56 : vector<8x128xi32>
    %cst_12 = arith.constant 0.000000e+00 : f32
    %58 = vector.shape_cast %52 : vector<8x1xf32> to vector<8x1xf32>
    %59 = vector.broadcast %58 : vector<8x1xf32> to vector<8x128xf32>
    %60 = vector.broadcast %cst_12 : f32 to vector<8x128xf32>
    %61 = arith.select %57, %59, %60 : vector<8x128xi1>, vector<8x128xf32>
    %62 = vector.shape_cast %45 : vector<8x1xf32> to vector<8x1xf32>
    %63 = vector.broadcast %62 : vector<8x1xf32> to vector<8x128xf32>
    %64 = arith.select %55, %63, %61 : vector<8x128xi1>, vector<8x128xf32>
    %c0_13 = arith.constant 0 : index
    %c0_14 = arith.constant 0 : index
    %c0_15 = arith.constant 0 : index
    %65 = vector.load %arg2[%c0_13, %c0_14, %c0_15] : memref<1x8x128xf32, #tpu.memory_space<vmem>>, vector<1x8x128xf32>
    %66 = vector.shape_cast %65 : vector<1x8x128xf32> to vector<8x128xf32>
    %67 = vector.shape_cast %64 : vector<8x128xf32> to vector<1x8x128xf32>
    tpu.vector_store %arg2[%c0_13, %c0_14, %c0_15], %67 {strides = array<i32>} : memref<1x8x128xf32, #tpu.memory_space<vmem>>, vector<1x8x128xf32>,
    return
  }
  func.func @transform_0(%arg0: i32) -> (i32, i32, i32) {
    %c0_i32 = arith.constant 0 : i32
    %c0_i32_0 = arith.constant 0 : i32
    %c0_i32_1 = arith.constant 0 : i32
    return %c0_i32, %arg0, %c0_i32_0 : i32, i32, i32
  }
  func.func @transform_1(%arg0: i32) -> (i32, i32, i32) {
    %c0_i32 = arith.constant 0 : i32
    %c0_i32_0 = arith.constant 0 : i32
    %c0_i32_1 = arith.constant 0 : i32
    return %arg0, %c0_i32, %c0_i32_0 : i32, i32, i32
  }
}

</mosaic_0001>

<llo_original>
// kernel: tpu_custom_call.1
$region0: #{tpu_custom_call.1}
  #allocation0 [shape = 'u32[]', space=smem, size = 0x4, offset = 0x4, fixed_abs, tag = 'smem constant byte address 0x4 - core index']
  #allocation1 [shape = 'u32[72,128]{1,0:T(1,128)}', space=vmem, size = 0x9000, scoped, tag = 'internal scratch']
  %s0 = inlined_call_operand.hbm [shape: f32[8,16,128], index: 0, kind: input, shape index: {}]
  %s1 = inlined_call_operand.hbm [shape: f32[1,8,128], index: 1, kind: output, shape index: {}]
  %s2 = sld [smem:[#allocation0]]
  $region18: #{tpu_custom_call.1} parent=0
    _
  %s4 = ssub.s32 1, %s2
  %s5 = scalar_select 0, %s4, %s2
  $region1: #{tpu_custom_call.1} parent=0
    #allocation2 [shape = 'u8[65536]{0}', space=vmem, size = 0x10000, scoped, tag = 'input window, operand 0, single buffered']
    #allocation3 [shape = 's32[1]{0}', space=sflag, size = 0x4, scoped, tag = 'scoped memory for tpu_custom_call.1']
    #allocation4 [shape = 's32[1]{0}', space=sflag, size = 0x4, scoped, tag = 'scoped memory for tpu_custom_call.1']
    #allocation5 [shape = 'u8[4096]{0}', space=vmem, size = 0x1000, scoped, tag = 'output window, operand 0, single buffered']
    %6 = vsyncpa [#allocation3], 0
    %7 = vsyncpa [#allocation4], 0
    // Predicated region
    $region2: #{tpu_custom_call.1} parent=1 // pred_check
      _
    $region3: #{tpu_custom_call.1} parent=1 // pred_check_branch
      %9 = sbr.rel (0) target = $region5
    $region4: #{tpu_custom_call.1} parent=1 // pred_region
      %11 = vsyncadd [#allocation3], 0
      %s12 = sshll.u32 %s0, 4
      %s13 = int_to_ptr.hbm [resolvable:$true] %s12
      %s14 = sshll.u32 [#allocation2], 4
      %s15 = int_to_ptr.vmem [resolvable:$true] %s14
      %20 = dma.hbm_to_vmem [thread:$0]  %s13, 2048, %s15, [#allocation3], 128, 128, 8
    $region5: #{tpu_custom_call.1} parent=1 // pred_fallthru
      _
    // Predicated region
    $region6: #{tpu_custom_call.1} parent=1 // pred_check
      _
    $region7: #{tpu_custom_call.1} parent=1 // pred_check_branch
      %22 = sbr.rel (0) target = $region9
    $region8: #{tpu_custom_call.1} parent=1 // pred_region
      %24 = dma.done [#allocation3], 2048
    $region9: #{tpu_custom_call.1} parent=1 // pred_fallthru
      _
    %v25 = vld [vmem:[#allocation2] sm:$0xff]
    %v26 = vld [vmem:[#allocation2 + $0x8] sm:$0xff]
    %v27 = vld [vmem:[#allocation2 + $0x10] sm:$0xff]
    %v28 = vld [vmem:[#allocation2 + $0x18] sm:$0xff]
    %v29 = vld [vmem:[#allocation2 + $0x20] sm:$0xff]
    %v30 = vld [vmem:[#allocation2 + $0x28] sm:$0xff]
    %v31 = vld [vmem:[#allocation2 + $0x30] sm:$0xff]
    %v32 = vld [vmem:[#allocation2 + $0x38] sm:$0xff]
    %v33 = vld [vmem:[#allocation2 + $0x40] sm:$0xff]
    %v34 = vld [vmem:[#allocation2 + $0x48] sm:$0xff]
    %v35 = vld [vmem:[#allocation2 + $0x50] sm:$0xff]
    %v36 = vld [vmem:[#allocation2 + $0x58] sm:$0xff]
    %v37 = vld [vmem:[#allocation2 + $0x60] sm:$0xff]
    %v38 = vld [vmem:[#allocation2 + $0x68] sm:$0xff]
    %v39 = vld [vmem:[#allocation2 + $0x70] sm:$0xff]
    %v40 = vld [vmem:[#allocation2 + $0x78] sm:$0xff]
    %s41 = smul.u32 0, 16
    %v42 = vlaneseq
    %v43 = vshrl.u32 %v42, 7
    %v44 = vadd.s32 %v43, 8
    %v45 = vstv %s41
    %v46 = vadd.s32 %v45, %v43
    %v47 = vadd.s32 %v45, %v44
    %vm48 = vcmp.lt.s32.totalorder %v46, 16
    %vm49 = vcmp.lt.s32.totalorder %v47, 16
    %v50 = vlaneseq
    %v51 = vand.u32 %v50, 127
    %vm52 = vcmp.lt.s32.totalorder %v51, 32
    %v53 = vsel %vm48, 1, 0
    %v54 = vsel %vm49, 1, 0
    %vm55 = vcmp.eq.s32.totalorder %v53, 1
    %vm56 = vcmp.eq.s32.totalorder %v54, 1
    %v57 = vsel %vm52, 1, 0
    %vm58 = vcmp.eq.s32.totalorder %v57, 1
    %vm59 = vmand %vm55, %vm58
    %vm60 = vmand %vm56, %vm58
    %v61 = vsel 1, %v25, -1e+30
    %v62 = vsel 1, %v26, -1e+30
    %v63 = vsel 1, %v27, -1e+30
    %v64 = vsel 1, %v28, -1e+30
    %v65 = vsel 0, %v29, -1e+30
    %v66 = vsel 0, %v30, -1e+30
    %v67 = vsel 0, %v31, -1e+30
    %v68 = vsel 0, %v32, -1e+30
    %v69 = vsel 0, %v33, -1e+30
    %v70 = vsel 0, %v34, -1e+30
    %v71 = vsel 0, %v35, -1e+30
    %v72 = vsel 0, %v36, -1e+30
    %v73 = vsel 0, %v37, -1e+30
    %v74 = vsel 0, %v38, -1e+30
    %v75 = vsel 0, %v39, -1e+30
    %v76 = vsel 0, %v40, -1e+30
    %v77 = vmax.f32 %v61, %v65
    %v78 = vmax.f32 %v63, %v67
    %v79 = vmax.f32 %v77, %v69
    %v80 = vmax.f32 %v78, %v71
    %v81 = vmax.f32 %v79, %v73
    %v82 = vmax.f32 %v80, %v75
    %v83 = vmax.f32 %v81, %v82
    %v84 = vmax.f32 %v62, %v66
    %v85 = vmax.f32 %v64, %v68
    %v86 = vmax.f32 %v84, %v70
    %v87 = vmax.f32 %v85, %v72
    %v88 = vmax.f32 %v86, %v74
    %v89 = vmax.f32 %v87, %v76
    %v90 = vmax.f32 %v88, %v89
    %v91 = vsub.f32 %v25, %v83
    %v92 = vsub.f32 %v26, %v90
    %v93 = vsub.f32 %v27, %v83
    %v94 = vsub.f32 %v28, %v90
    %v95 = vsub.f32 %v29, %v83
    %v96 = vsub.f32 %v30, %v90
    %v97 = vsub.f32 %v31, %v83
    %v98 = vsub.f32 %v32, %v90
    %v99 = vsub.f32 %v33, %v83
    %v100 = vsub.f32 %v34, %v90
    %v101 = vsub.f32 %v35, %v83
    %v102 = vsub.f32 %v36, %v90
    %v103 = vsub.f32 %v37, %v83
    %v104 = vsub.f32 %v38, %v90
    %v105 = vsub.f32 %v39, %v83
    %v106 = vsub.f32 %v40, %v90
    %v107 = vmul.f32 %v91, 1.442695
    %v108 = vpow.pop %v107
    %v109 = vmul.f32 %v92, 1.442695
    %v110 = vpow.pop %v109
    %v111 = vmul.f32 %v93, 1.442695
    %v112 = vpow.pop %v111
    %v113 = vmul.f32 %v94, 1.442695
    %v114 = vpow.pop %v113
    %v115 = vmul.f32 %v95, 1.442695
    %v116 = vpow.pop %v115
    %v117 = vmul.f32 %v96, 1.442695
    %v118 = vpow.pop %v117
    %v119 = vmul.f32 %v97, 1.442695
    %v120 = vpow.pop %v119
    %v121 = vmul.f32 %v98, 1.442695
    %v122 = vpow.pop %v121
    %v123 = vmul.f32 %v99, 1.442695
    %v124 = vpow.pop %v123
    %v125 = vmul.f32 %v100, 1.442695
    %v126 = vpow.pop %v125
    %v127 = vmul.f32 %v101, 1.442695
    %v128 = vpow.pop %v127
    %v129 = vmul.f32 %v102, 1.442695
    %v130 = vpow.pop %v129
    %v131 = vmul.f32 %v103, 1.442695
    %v132 = vpow.pop %v131
    %v133 = vmul.f32 %v104, 1.442695
    %v134 = vpow.pop %v133
    %v135 = vmul.f32 %v105, 1.442695
    %v136 = vpow.pop %v135
    %v137 = vmul.f32 %v106, 1.442695
    %v138 = vpow.pop %v137
    %v139 = vsel 1, %v108, 0.0
    %v140 = vsel 1, %v110, 0.0
    %v141 = vsel 1, %v112, 0.0
    %v142 = vsel 1, %v114, 0.0
    %v143 = vsel 0, %v116, 0.0
    %v144 = vsel 0, %v118, 0.0
    %v145 = vsel 0, %v120, 0.0
    %v146 = vsel 0, %v122, 0.0
    %v147 = vsel 0, %v124, 0.0
    %v148 = vsel 0, %v126, 0.0
    %v149 = vsel 0, %v128, 0.0
    %v150 = vsel 0, %v130, 0.0
    %v151 = vsel 0, %v132, 0.0
    %v152 = vsel 0, %v134, 0.0
    %v153 = vsel 0, %v136, 0.0
    %v154 = vsel 0, %v138, 0.0
    %v155 = vadd.f32 %v139, %v141
    %v156 = vadd.f32 %v155, %v143
    %v157 = vadd.f32 %v156, %v145
    %v158 = vadd.f32 %v157, %v147
    %v159 = vadd.f32 %v158, %v149
    %v160 = vadd.f32 %v159, %v151
    %v161 = vadd.f32 %v160, %v153
    %v162 = vadd.f32 %v140, %v142
    %v163 = vadd.f32 %v162, %v144
    %v164 = vadd.f32 %v163, %v146
    %v165 = vadd.f32 %v164, %v148
    %v166 = vadd.f32 %v165, %v150
    %v167 = vadd.f32 %v166, %v152
    %v168 = vadd.f32 %v167, %v154
    %v169 = vlog2.pop %v161
    %v170 = vmul.f32 %v169, 0.6931472
    %v171 = vlog2.pop %v168
    %v172 = vmul.f32 %v171, 0.6931472
    %v173 = vrcp.pop %v161
    %v174 = vmul.f32 %v161, %v173
    %v175 = vsub.f32 1.0, %v174
    %v176 = vmul.f32 %v173, %v175
    %v177 = vadd.f32 %v173, %v176
    %vm178 = vweird.f32 %v161
    %vm179 = vweird.f32 %v173
    %vm180 = vmor %vm178, %vm179
    %v181 = vsel %vm180, %v173, %v177
    %v182 = vand.u32 2147483647, %v161
    %vm183 = vcmp.eq.f32.partialorder %v182, 8.507059e+37
    %v184 = vand.u32 %v161, 2147483648
    %v185 = vor.u32 1.1754944e-38, %v184
    %v186 = vsel %vm183, %v185, %v181
    %v187 = vmul.f32 %v139, %v186
    %v188 = vrcp.pop %v168
    %v189 = vmul.f32 %v168, %v188
    %v190 = vsub.f32 1.0, %v189
    %v191 = vmul.f32 %v188, %v190
    %v192 = vadd.f32 %v188, %v191
    %vm193 = vweird.f32 %v168
    %vm194 = vweird.f32 %v188
    %vm195 = vmor %vm193, %vm194
    %v196 = vsel %vm195, %v188, %v192
    %v197 = vand.u32 2147483647, %v168
    %vm198 = vcmp.eq.f32.partialorder %v197, 8.507059e+37
    %v199 = vand.u32 %v168, 2147483648
    %v200 = vor.u32 1.1754944e-38, %v199
    %v201 = vsel %vm198, %v200, %v196
    %v202 = vmul.f32 %v140, %v201
    %v203 = vmul.f32 %v141, %v186
    %v204 = vmul.f32 %v142, %v201
    %v205 = vmul.f32 %v143, %v186
    %v206 = vmul.f32 %v144, %v201
    %v207 = vmul.f32 %v145, %v186
    %v208 = vmul.f32 %v146, %v201
    %v209 = vmul.f32 %v147, %v186
    %v210 = vmul.f32 %v148, %v201
    %v211 = vmul.f32 %v149, %v186
    %v212 = vmul.f32 %v150, %v201
    %v213 = vmul.f32 %v151, %v186
    %v214 = vmul.f32 %v152, %v201
    %v215 = vmul.f32 %v153, %v186
    %v216 = vmul.f32 %v154, %v201
    %v217 = vsub.f32 %v170, %v91
    %v218 = vsub.f32 %v172, %v92
    %v219 = vsub.f32 %v170, %v93
    %v220 = vsub.f32 %v172, %v94
    %v221 = vsub.f32 %v170, %v95
    %v222 = vsub.f32 %v172, %v96
    %v223 = vsub.f32 %v170, %v97
    %v224 = vsub.f32 %v172, %v98
    %v225 = vsub.f32 %v170, %v99
    %v226 = vsub.f32 %v172, %v100
    %v227 = vsub.f32 %v170, %v101
    %v228 = vsub.f32 %v172, %v102
    %v229 = vsub.f32 %v170, %v103
    %v230 = vsub.f32 %v172, %v104
    %v231 = vsub.f32 %v170, %v105
    %v232 = vsub.f32 %v172, %v106
    %v233 = vmul.f32 %v187, %v217
    %v234 = vmul.f32 %v202, %v218
    %v235 = vmul.f32 %v203, %v219
    %v236 = vmul.f32 %v204, %v220
    %v237 = vmul.f32 %v205, %v221
    %v238 = vmul.f32 %v206, %v222
    %v239 = vmul.f32 %v207, %v223
    %v240 = vmul.f32 %v208, %v224
    %v241 = vmul.f32 %v209, %v225
    %v242 = vmul.f32 %v210, %v226
    %v243 = vmul.f32 %v211, %v227
    %v244 = vmul.f32 %v212, %v228
    %v245 = vmul.f32 %v213, %v229
    %v246 = vmul.f32 %v214, %v230
    %v247 = vmul.f32 %v215, %v231
    %v248 = vmul.f32 %v216, %v232
    %v249 = vsel %vm59, 1, 0
    %v250 = vsel %vm60, 1, 0
    %vm251 = vcmp.eq.s32.totalorder %v249, 1
    %vm252 = vcmp.eq.s32.totalorder %v250, 1
    %v253 = vsel %vm251, %v233, 0.0
    %v254 = vsel %vm252, %v234, 0.0
    %v255 = vsel %vm251, %v235, 0.0
    %v256 = vsel %vm252, %v236, 0.0
    %v257 = vsel %vm251, %v237, 0.0
    %v258 = vsel %vm252, %v238, 0.0
    %v259 = vsel %vm251, %v239, 0.0
    %v260 = vsel %vm252, %v240, 0.0
    %v261 = vsel %vm251, %v241, 0.0
    %v262 = vsel %vm252, %v242, 0.0
    %v263 = vsel %vm251, %v243, 0.0
    %v264 = vsel %vm252, %v244, 0.0
    %v265 = vsel %vm251, %v245, 0.0
    %v266 = vsel %vm252, %v246, 0.0
    %v267 = vsel %vm251, %v247, 0.0
    %v268 = vsel %vm252, %v248, 0.0
    %269 = vadd.xlane.f32.xlu0 %v253
    %v270 = vpop.xlane.xlu0 %269
    %271 = vadd.xlane.f32.xlu0 %v254
    %v272 = vpop.xlane.xlu0 %271
    %273 = vadd.xlane.f32.xlu0 %v255
    %v274 = vpop.xlane.xlu0 %273
    %275 = vadd.xlane.f32.xlu0 %v256
    %v276 = vpop.xlane.xlu0 %275
    %277 = vadd.xlane.f32.xlu0 %v257
    %v278 = vpop.xlane.xlu0 %277
    %279 = vadd.xlane.f32.xlu0 %v258
    %v280 = vpop.xlane.xlu0 %279
    %281 = vadd.xlane.f32.xlu0 %v259
    %v282 = vpop.xlane.xlu0 %281
    %283 = vadd.xlane.f32.xlu0 %v260
    %v284 = vpop.xlane.xlu0 %283
    %285 = vadd.xlane.f32.xlu0 %v261
    %v286 = vpop.xlane.xlu0 %285
    %287 = vadd.xlane.f32.xlu0 %v262
    %v288 = vpop.xlane.xlu0 %287
    %289 = vadd.xlane.f32.xlu0 %v263
    %v290 = vpop.xlane.xlu0 %289
    %291 = vadd.xlane.f32.xlu0 %v264
    %v292 = vpop.xlane.xlu0 %291
    %293 = vadd.xlane.f32.xlu0 %v265
    %v294 = vpop.xlane.xlu0 %293
    %295 = vadd.xlane.f32.xlu0 %v266
    %v296 = vpop.xlane.xlu0 %295
    %297 = vadd.xlane.f32.xlu0 %v267
    %v298 = vpop.xlane.xlu0 %297
    %299 = vadd.xlane.f32.xlu0 %v268
    %v300 = vpop.xlane.xlu0 %299
    %v317 = vperm.slane %v270, %v51
    %v318 = vadd.s32 %v51, 4294967288
    %v319 = vperm.slane %v272, %v318
    %vm320 = vcmask 130112
    %v321 = vsel %vm320, %v319, %v317
    %v322 = vperm.slane %v274, %v51
    %v323 = vperm.slane %v276, %v318
    %v324 = vsel %vm320, %v323, %v322
    %v325 = vperm.slane %v278, %v51
    %v326 = vperm.slane %v280, %v318
    %v327 = vsel %vm320, %v326, %v325
    %v328 = vperm.slane %v282, %v51
    %v329 = vperm.slane %v284, %v318
    %v330 = vsel %vm320, %v329, %v328
    %v331 = vperm.slane %v286, %v51
    %v332 = vperm.slane %v288, %v318
    %v333 = vsel %vm320, %v332, %v331
    %v334 = vperm.slane %v290, %v51
    %v335 = vperm.slane %v292, %v318
    %v336 = vsel %vm320, %v335, %v334
    %v337 = vperm.slane %v294, %v51
    %v338 = vperm.slane %v296, %v318
    %v339 = vsel %vm320, %v338, %v337
    %v340 = vperm.slane %v298, %v51
    %v341 = vperm.slane %v300, %v318
    %v342 = vsel %vm320, %v341, %v340
    %vm343 = vcmask 1041409
    %v344 = vsel %vm343, %v324, %v321
    %vm345 = vcmask 1042434
    %v346 = vsel %vm345, %v327, %v344
    %vm347 = vcmask 1043459
    %v348 = vsel %vm347, %v330, %v346
    %vm349 = vcmask 1044484
    %v350 = vsel %vm349, %v333, %v348
    %vm351 = vcmask 1045509
    %v352 = vsel %vm351, %v336, %v350
    %vm353 = vcmask 1046534
    %v354 = vsel %vm353, %v339, %v352
    %vm355 = vcmask 1047559
    %v356 = vsel %vm355, %v342, %v354
    %vm358 = vcmask 130048
    %v359 = vsel %vm358, %v356, 0.0
    %360 = vadd.xlane.f32.xlu0 %v359
    %v361 = vpop.xlane.xlu0 %360
    %v362 = vsel %vm251, %v25, 0.0
    %v363 = vsel %vm252, %v26, 0.0
    %v364 = vsel %vm251, %v27, 0.0
    %v365 = vsel %vm252, %v28, 0.0
    %v366 = vsel %vm251, %v29, 0.0
    %v367 = vsel %vm252, %v30, 0.0
    %v368 = vsel %vm251, %v31, 0.0
    %v369 = vsel %vm252, %v32, 0.0
    %v370 = vsel %vm251, %v33, 0.0
    %v371 = vsel %vm252, %v34, 0.0
    %v372 = vsel %vm251, %v35, 0.0
    %v373 = vsel %vm252, %v36, 0.0
    %v374 = vsel %vm251, %v37, 0.0
    %v375 = vsel %vm252, %v38, 0.0
    %v376 = vsel %vm251, %v39, 0.0
    %v377 = vsel %vm252, %v40, 0.0
    %378 = vadd.xlane.f32.xlu0 %v362
    %v379 = vpop.xlane.xlu0 %378
    %380 = vadd.xlane.f32.xlu0 %v363
    %v381 = vpop.xlane.xlu0 %380
    %382 = vadd.xlane.f32.xlu0 %v364
    %v383 = vpop.xlane.xlu0 %382
    %384 = vadd.xlane.f32.xlu0 %v365
    %v385 = vpop.xlane.xlu0 %384
    %386 = vadd.xlane.f32.xlu0 %v366
    %v387 = vpop.xlane.xlu0 %386
    %388 = vadd.xlane.f32.xlu0 %v367
    %v389 = vpop.xlane.xlu0 %388
    %390 = vadd.xlane.f32.xlu0 %v368
    %v391 = vpop.xlane.xlu0 %390
    %392 = vadd.xlane.f32.xlu0 %v369
    %v393 = vpop.xlane.xlu0 %392
    %394 = vadd.xlane.f32.xlu0 %v370
    %v395 = vpop.xlane.xlu0 %394
    %396 = vadd.xlane.f32.xlu0 %v371
    %v397 = vpop.xlane.xlu0 %396
    %398 = vadd.xlane.f32.xlu0 %v372
    %v399 = vpop.xlane.xlu0 %398
    %400 = vadd.xlane.f32.xlu0 %v373
    %v401 = vpop.xlane.xlu0 %400
    %402 = vadd.xlane.f32.xlu0 %v374
    %v403 = vpop.xlane.xlu0 %402
    %404 = vadd.xlane.f32.xlu0 %v375
    %v405 = vpop.xlane.xlu0 %404
    %406 = vadd.xlane.f32.xlu0 %v376
    %v407 = vpop.xlane.xlu0 %406
    %408 = vadd.xlane.f32.xlu0 %v377
    %v409 = vpop.xlane.xlu0 %408
    %v426 = vperm.slane %v379, %v51
    %v427 = vperm.slane %v381, %v318
    %v428 = vsel %vm320, %v427, %v426
    %v429 = vperm.slane %v383, %v51
    %v430 = vperm.slane %v385, %v318
    %v431 = vsel %vm320, %v430, %v429
    %v432 = vperm.slane %v387, %v51
    %v433 = vperm.slane %v389, %v318
    %v434 = vsel %vm320, %v433, %v432
    %v435 = vperm.slane %v391, %v51
    %v436 = vperm.slane %v393, %v318
    %v437 = vsel %vm320, %v436, %v435
    %v438 = vperm.slane %v395, %v51
    %v439 = vperm.slane %v397, %v318
    %v440 = vsel %vm320, %v439, %v438
    %v441 = vperm.slane %v399, %v51
    %v442 = vperm.slane %v401, %v318
    %v443 = vsel %vm320, %v442, %v441
    %v444 = vperm.slane %v403, %v51
    %v445 = vperm.slane %v405, %v318
    %v446 = vsel %vm320, %v445, %v444
    %v447 = vperm.slane %v407, %v51
    %v448 = vperm.slane %v409, %v318
    %v449 = vsel %vm320, %v448, %v447
    %v450 = vsel %vm343, %v431, %v428
    %v451 = vsel %vm345, %v434, %v450
    %v452 = vsel %vm347, %v437, %v451
    %v453 = vsel %vm349, %v440, %v452
    %v454 = vsel %vm351, %v443, %v453
    %v455 = vsel %vm353, %v446, %v454
    %v456 = vsel %vm355, %v449, %v455
    %v458 = vsel %vm358, %v456, 0.0
    %459 = vadd.xlane.f32.xlu0 %v458
    %v460 = vpop.xlane.xlu0 %459
    %vm461 = vcmp.eq.s32.totalorder %v51, 0
    %vm462 = vcmp.eq.s32.totalorder %v51, 1
    %v463 = vsel %vm462, %v460, 0.0
    %v464 = vsel %vm461, %v361, %v463
    %465 = vst [vmem:[#allocation5] sm:$0xff] %v464
    // Predicated region
    $region10: #{tpu_custom_call.1} parent=1 // pred_check
      _
    $region11: #{tpu_custom_call.1} parent=1 // pred_check_branch
      %467 = sbr.rel (0) target = $region13
    $region12: #{tpu_custom_call.1} parent=1 // pred_region
      %469 = vsyncadd [#allocation4], 0
      %s471 = sshll.u32 [#allocation5], 4
      %s472 = int_to_ptr.vmem [resolvable:$true] %s471
      %s473 = sshll.u32 %s1, 4
      %s474 = int_to_ptr.hbm [resolvable:$true] %s473
      %476 = dma.vmem_to_hbm [thread:$0]  %s472, 128, %s474, [#allocation4]
    $region13: #{tpu_custom_call.1} parent=1 // pred_fallthru
      _
    // Predicated region
    $region14: #{tpu_custom_call.1} parent=1 // pred_check
      _
    $region15: #{tpu_custom_call.1} parent=1 // pred_check_branch
      %478 = sbr.rel (0) target = $region17
    $region16: #{tpu_custom_call.1} parent=1 // pred_region
      %480 = dma.done [#allocation4], 128
    $region17: #{tpu_custom_call.1} parent=1 // pred_fallthru
      _
    %481 = vsyncpa [#allocation3], 1
    %482 = vsyncpa [#allocation4], 1

</llo_original>
